<compile_context>
chip_gen: v7x
topology: tpu7x:2x2x1
jax: 0.10.0
libtpu: 0.0.40
codegen_flags: <defaults>
</compile_context>

<pallas_src>
import functools

import jax
import jax.numpy as jnp
from jax.experimental import pallas as pl
from jax.experimental.pallas import tpu as pltpu


# -----------------------------------------------------------------------------
# Config (synthetic, mirrors Config.EXAMPLE.n / N_HIDDEN_NEURONS / ACTIVATION)
# -----------------------------------------------------------------------------
INPUT_DIM = 4
N_HIDDEN_NEURONS = (16, 16, 16, 16)
ACTIVATION = ("SQUARE", "SKIP", "MUL", "LINEAR")
BATCH = 8


# -----------------------------------------------------------------------------
# Parameter packing (host-side, done once): pre-transpose weights to (in, out),
# pad each block to a multiple of 8 rows, and concatenate into one buffer.
# Offsets / dims are static Python ints baked into the kernel.
# -----------------------------------------------------------------------------
def prepare_params(layer_params, w_last, activations, input_dim):
    widths = [w1.shape[0] for (w1, _, _, _) in layer_params]  # n_hid per layer
    wmax = max(widths + [w_last.shape[1]])

    blocks = []
    cur = 0

    def _add(mat):
        nonlocal cur
        mat = jnp.asarray(mat, jnp.float32)
        r, c = mat.shape
        rp = ((r + 7) // 8) * 8
        blocks.append(jnp.pad(mat, ((0, rp - r), (0, wmax - c))))
        off = cur
        cur += rp
        return off

    layer_meta = []
    n_prev = input_dim
    for (w1, b1, w2, b2), act in zip(layer_params, activations):
        n_hid = w1.shape[0]
        ow1 = _add(w1.T)                      # (n_prev, n_hid)
        ob1 = _add(b1.reshape(1, -1))         # (1, n_hid)
        if act in ("SKIP", "MUL"):
            in2 = w2.shape[1]
            ow2 = _add(w2.T)                  # (in2, n_hid)
            ob2 = _add(b2.reshape(1, -1))     # (1, n_hid)
        else:                                 # SQUARE / LINEAR: layer2 unused
            in2, ow2, ob2 = 0, 0, 0
        layer_meta.append((n_prev, n_hid, in2, ow1, ob1, ow2, ob2))
        n_prev = n_hid

    owl = _add(jnp.asarray(w_last, jnp.float32))   # stored as a (1, n_last) row
    n_last = w_last.shape[1]

    packed = jnp.concatenate(blocks, axis=0)
    meta = (tuple(layer_meta), owl, n_last)
    return packed, meta


# -----------------------------------------------------------------------------
# Kernel: single fused pass over the stacked [T; center; l; l1_dot] matrix.
# Rows 0:3B are primal, rows 3B:4B are the JVP tangent for `l`.
# -----------------------------------------------------------------------------
def _make_kernel(activations, layer_meta, owl, n_last, B):
    n2 = 2 * B
    n3 = 3 * B
    n4 = 4 * B

    def kernel(t_ref, c_ref, l_ref, d_ref, p_ref, o_ref):
        # Stack the four evaluation points in-kernel: [T; center; l; l1_dot].
        X = jnp.concatenate(
            [t_ref[...], c_ref[...], l_ref[...], d_ref[...]], axis=0
        )                                                # (4B, n_in) f32
        row = jax.lax.broadcasted_iota(jnp.int32, (n4, 1), 0)
        bias_mask = (row < n3).astype(jnp.float32)       # 1 on primal rows only

        Y = X
        for act, (n_prev, n_hid, in2, ow1, ob1, ow2, ob2) in zip(
                activations, layer_meta):
            w1 = p_ref[ow1:ow1 + n_prev, :n_hid]         # (n_prev, n_hid)
            b1 = p_ref[ob1:ob1 + 1, :n_hid]              # (1, n_hid)
            z1 = jnp.dot(Y, w1, preferred_element_type=jnp.float32)
            z1 = z1 + bias_mask * b1                     # bias only on primal rows

            if act == "LINEAR":
                Y = z1
            elif act == "SQUARE":
                zp = z1[:n3]                             # primal z
                zl = z1[n2:n3]                           # z at the `l` rows
                zd = z1[n3:]                             # tangent z
                Y = jnp.concatenate([zp * zp, 2.0 * zl * zd], axis=0)
            else:                                        # SKIP or MUL
                w2 = p_ref[ow2:ow2 + in2, :n_hid]
                b2 = p_ref[ob2:ob2 + 1, :n_hid]
                src = X if act == "SKIP" else Y          # SKIP uses original input
                z2 = jnp.dot(src, w2, preferred_element_type=jnp.float32)
                z2 = z2 + bias_mask * b2
                yp = z1[:n3] * z2[:n3]
                yd = z1[n3:] * z2[n2:n3] + z1[n2:n3] * z2[n3:]
                Y = jnp.concatenate([yp, yd], axis=0)

        wlast = p_ref[owl:owl + 1, :n_last]              # (1, n_last)
        # final 1-wide projection as an elementwise mul + lane reduction
        o_ref[...] = jnp.sum(Y * wlast, axis=-1, keepdims=True)   # (4B, 1)

    return kernel


# -----------------------------------------------------------------------------
# Wrapper
# -----------------------------------------------------------------------------
@functools.partial(jax.jit, static_argnames=("activations", "meta"))
def net_forward(T, l, l1_dot, center, packed, activations, meta):
    """Pallas forward pass. Returns (v_t, v_y, v_grad, v_center)."""
    B = T.shape[0]
    layer_meta, owl, n_last = meta

    kernel = _make_kernel(activations, layer_meta, owl, n_last, B)
    vmem = pl.BlockSpec(memory_space=pltpu.MemorySpace.VMEM)
    out = pl.pallas_call(
        kernel,
        out_shape=jax.ShapeDtypeStruct((4 * B, 1), jnp.float32),
        in_specs=[vmem, vmem, vmem, vmem, vmem],
        out_specs=vmem,
    )(T.astype(jnp.float32), center.astype(jnp.float32),
      l.astype(jnp.float32), l1_dot.astype(jnp.float32), packed)

    v_t = out[0:B]
    v_center = out[B:2 * B]
    v_y = out[2 * B:3 * B]
    v_grad = out[3 * B:4 * B, 0]                         # PyTorch returns (B,)
    return v_t, v_y, v_grad, v_center


# -----------------------------------------------------------------------------
# Deterministic parameter initialization (PyTorch Linear-style uniform)
# -----------------------------------------------------------------------------
def init_params(key):
    params = []
    n_prev = INPUT_DIM
    for n_hid, act in zip(N_HIDDEN_NEURONS, ACTIVATION):
        k1, k2, k3, k4, key = jax.random.split(key, 5)
        bound1 = 1.0 / jnp.sqrt(n_prev)
        in2 = INPUT_DIM if act == "SKIP" else n_prev
        bound2 = 1.0 / jnp.sqrt(in2)
        w1 = jax.random.uniform(k1, (n_hid, n_prev), jnp.float32, -bound1, bound1)
        b1 = jax.random.uniform(k2, (1, n_hid), jnp.float32, -bound1, bound1)
        w2 = jax.random.uniform(k3, (n_hid, in2), jnp.float32, -bound2, bound2)
        b2 = jax.random.uniform(k4, (1, n_hid), jnp.float32, -bound2, bound2)
        params.append((w1, b1, w2, b2))
        n_prev = n_hid
    kf, key = jax.random.split(key)
    bound = 1.0 / jnp.sqrt(n_prev)
    w_last = jax.random.uniform(kf, (1, n_prev), jnp.float32, -bound, bound)
    return params, w_last, key


# -----------------------------------------------------------------------------
# Pure-JAX reference (mirrors the PyTorch diag_embed Jacobian path) for a sanity
# check of the kernel output.
# -----------------------------------------------------------------------------
def reference_forward(T, l, l1_dot, center, params, w_last):
    def net_out(x):
        y = x
        for (w1, b1, w2, b2), act in zip(params, ACTIVATION):
            z1 = y @ w1.T + b1
            if act == "SQUARE":
                y = z1 ** 2
            elif act == "SKIP":
                y = z1 * (x @ w2.T + b2)
            elif act == "MUL":
                y = z1 * (y @ w2.T + b2)
            else:
                y = z1
        return y @ w_last.T

    def get_gradient(x, xdot):
        B = x.shape[0]
        y = x
        J = jnp.broadcast_to(jnp.eye(INPUT_DIM), (B, INPUT_DIM, INPUT_DIM))
        for (w1, b1, w2, b2), act in zip(params, ACTIVATION):
            z1 = y @ w1.T + b1
            if act == "SQUARE":
                y = z1 ** 2
                J = jnp.einsum("bhp,bpn->bhn", 2.0 * z1[:, :, None] * w1[None], J)
            elif act == "SKIP":
                z2 = x @ w2.T + b2
                y = z1 * z2
                J = z1[:, :, None] * w2[None] + jnp.einsum(
                    "bhp,bpn->bhn", z2[:, :, None] * w1[None], J)
            elif act == "MUL":
                z2 = y @ w2.T + b2
                y = z1 * z2
                grad = z1[:, :, None] * w2[None] + z2[:, :, None] * w1[None]
                J = jnp.einsum("bhp,bpn->bhn", grad, J)
            else:
                y = z1
                J = jnp.einsum("hp,bpn->bhn", w1, J)
        J = jnp.einsum("op,bpn->bon", w_last, J)
        return jnp.sum(J[:, 0, :] * xdot, axis=1)

    return net_out(T), net_out(l), get_gradient(l, l1_dot), net_out(center)


# -----------------------------------------------------------------------------
if __name__ == "__main__":
    key = jax.random.PRNGKey(0)
    params, w_last, key = init_params(key)

    kT, kl, kd, kc = jax.random.split(key, 4)
    T = jax.random.normal(kT, (BATCH, INPUT_DIM), jnp.float32)
    l = jax.random.normal(kl, (BATCH, INPUT_DIM), jnp.float32)
    l1_dot = jax.random.normal(kd, (BATCH, INPUT_DIM), jnp.float32)
    center = jax.random.normal(kc, (BATCH, INPUT_DIM), jnp.float32)

    # pack weights once (pre-transposed, 8-row-aligned, single buffer)
    packed, meta = prepare_params(params, w_last, ACTIVATION, INPUT_DIM)

    outs = net_forward(T, l, l1_dot, center, packed, ACTIVATION, meta)
    outs = jax.block_until_ready(outs)
    v_t, v_y, v_grad, v_center = outs

    # sanity check against the plain-JAX reference (PyTorch-equivalent math)
    r_t, r_y, r_grad, r_center = reference_forward(T, l, l1_dot, center, params, w_last)
    assert jnp.allclose(v_t, r_t, atol=1e-4, rtol=1e-4)
    assert jnp.allclose(v_y, r_y, atol=1e-4, rtol=1e-4)
    assert jnp.allclose(v_grad, r_grad, atol=1e-4, rtol=1e-4)
    assert jnp.allclose(v_center, r_center, atol=1e-4, rtol=1e-4)
    assert v_t.shape == (BATCH, 1) and v_grad.shape == (BATCH,)

    # TODO(synk): get_barriers/sp_net (sympy symbolic expression extraction) has
    # no numeric Pallas equivalent and is intentionally not implemented.
    print("KERNEL_OK")
</pallas_src>

<mosaic_0001>
module attributes {stable_mosaic.version = 11 : i64} {
  func.func @kernel(%arg0: memref<8x4xf32, #tpu.memory_space<vmem>>, %arg1: memref<8x4xf32, #tpu.memory_space<vmem>>, %arg2: memref<8x4xf32, #tpu.memory_space<vmem>>, %arg3: memref<8x4xf32, #tpu.memory_space<vmem>>, %arg4: memref<136x16xf32, #tpu.memory_space<vmem>>, %arg5: memref<32x1xf32, #tpu.memory_space<vmem>>) attributes {dimension_semantics = [], scalar_prefetch = 0 : i64, scratch_operands = 0 : i64, tpu.core_type = #tpu.core_type<tc>} {
    %c0 = arith.constant 0 : index
    %c0_0 = arith.constant 0 : index
    %0 = vector.load %arg0[%c0, %c0_0] : memref<8x4xf32, #tpu.memory_space<vmem>>, vector<8x4xf32>
    %c0_1 = arith.constant 0 : index
    %c0_2 = arith.constant 0 : index
    %1 = vector.load %arg1[%c0_1, %c0_2] : memref<8x4xf32, #tpu.memory_space<vmem>>, vector<8x4xf32>
    %c0_3 = arith.constant 0 : index
    %c0_4 = arith.constant 0 : index
    %2 = vector.load %arg2[%c0_3, %c0_4] : memref<8x4xf32, #tpu.memory_space<vmem>>, vector<8x4xf32>
    %c0_5 = arith.constant 0 : index
    %c0_6 = arith.constant 0 : index
    %3 = vector.load %arg3[%c0_5, %c0_6] : memref<8x4xf32, #tpu.memory_space<vmem>>, vector<8x4xf32>
    %4 = tpu.concatenate %0, %1, %2, %3 in 0 : vector<8x4xf32>, vector<8x4xf32>, vector<8x4xf32>, vector<8x4xf32> -> vector<32x4xf32>
    %5 = tpu.iota {dimensions = array<i32: 0>} : vector<32x1xi32>
    %c24_i32 = arith.constant 24 : i32
    %6 = vector.broadcast %c24_i32 : i32 to vector<32x1xi32>
    %7 = arith.cmpi slt, %5, %6 : vector<32x1xi32>
    %8 = arith.extui %7 : vector<32x1xi1> to vector<32x1xi32>
    %9 = arith.sitofp %8 : vector<32x1xi32> to vector<32x1xf32>
    %c0_7 = arith.constant 0 : index
    %c0_8 = arith.constant 0 : index
    %10 = vector.load %arg4[%c0_7, %c0_8] : memref<136x16xf32, #tpu.memory_space<vmem>>, vector<4x16xf32>
    %c8 = arith.constant 8 : index
    %c0_9 = arith.constant 0 : index
    %11 = vector.load %arg4[%c8, %c0_9] : memref<136x16xf32, #tpu.memory_space<vmem>>, vector<1x16xf32>
    %cst = arith.constant dense<0.000000e+00> : vector<32x16xf32>
    %12 = tpu.matmul %4, %10, %cst {dimension_numbers = #tpu.dot_dimension_numbers<[1], [0], [0], [1], [0, 0, 1, 1], [], []>} : vector<32x4xf32>, vector<4x16xf32>, vector<32x16xf32> -> vector<32x16xf32>
    %13 = vector.broadcast %9 : vector<32x1xf32> to vector<32x16xf32>
    %14 = vector.broadcast %11 : vector<1x16xf32> to vector<32x16xf32>
    %15 = arith.mulf %13, %14 : vector<32x16xf32>
    %16 = arith.addf %12, %15 : vector<32x16xf32>
    %17 = vector.extract_strided_slice %16 {offsets = [0, 0], sizes = [24, 16], strides = [1, 1]} : vector<32x16xf32> to vector<24x16xf32>
    %18 = vector.extract_strided_slice %16 {offsets = [16, 0], sizes = [8, 16], strides = [1, 1]} : vector<32x16xf32> to vector<8x16xf32>
    %19 = vector.extract_strided_slice %16 {offsets = [24, 0], sizes = [8, 16], strides = [1, 1]} : vector<32x16xf32> to vector<8x16xf32>
    %20 = arith.mulf %17, %17 : vector<24x16xf32>
    %cst_10 = arith.constant 2.000000e+00 : f32
    %21 = vector.broadcast %cst_10 : f32 to vector<8x16xf32>
    %22 = arith.mulf %21, %18 : vector<8x16xf32>
    %23 = arith.mulf %22, %19 : vector<8x16xf32>
    %24 = tpu.concatenate %20, %23 in 0 : vector<24x16xf32>, vector<8x16xf32> -> vector<32x16xf32>
    %c16 = arith.constant 16 : index
    %c0_11 = arith.constant 0 : index
    %25 = vector.load %arg4[%c16, %c0_11] : memref<136x16xf32, #tpu.memory_space<vmem>>, vector<16x16xf32>
    %c32 = arith.constant 32 : index
    %c0_12 = arith.constant 0 : index
    %26 = vector.load %arg4[%c32, %c0_12] : memref<136x16xf32, #tpu.memory_space<vmem>>, vector<1x16xf32>
    %cst_13 = arith.constant dense<0.000000e+00> : vector<32x16xf32>
    %27 = tpu.matmul %24, %25, %cst_13 {dimension_numbers = #tpu.dot_dimension_numbers<[1], [0], [0], [1], [0, 0, 1, 1], [], []>} : vector<32x16xf32>, vector<16x16xf32>, vector<32x16xf32> -> vector<32x16xf32>
    %28 = vector.broadcast %9 : vector<32x1xf32> to vector<32x16xf32>
    %29 = vector.broadcast %26 : vector<1x16xf32> to vector<32x16xf32>
    %30 = arith.mulf %28, %29 : vector<32x16xf32>
    %31 = arith.addf %27, %30 : vector<32x16xf32>
    %c40 = arith.constant 40 : index
    %c0_14 = arith.constant 0 : index
    %32 = vector.load %arg4[%c40, %c0_14] : memref<136x16xf32, #tpu.memory_space<vmem>>, vector<4x16xf32>
    %c48 = arith.constant 48 : index
    %c0_15 = arith.constant 0 : index
    %33 = vector.load %arg4[%c48, %c0_15] : memref<136x16xf32, #tpu.memory_space<vmem>>, vector<1x16xf32>
    %cst_16 = arith.constant dense<0.000000e+00> : vector<32x16xf32>
    %34 = tpu.matmul %4, %32, %cst_16 {dimension_numbers = #tpu.dot_dimension_numbers<[1], [0], [0], [1], [0, 0, 1, 1], [], []>} : vector<32x4xf32>, vector<4x16xf32>, vector<32x16xf32> -> vector<32x16xf32>
    %35 = vector.broadcast %9 : vector<32x1xf32> to vector<32x16xf32>
    %36 = vector.broadcast %33 : vector<1x16xf32> to vector<32x16xf32>
    %37 = arith.mulf %35, %36 : vector<32x16xf32>
    %38 = arith.addf %34, %37 : vector<32x16xf32>
    %39 = vector.extract_strided_slice %31 {offsets = [0, 0], sizes = [24, 16], strides = [1, 1]} : vector<32x16xf32> to vector<24x16xf32>
    %40 = vector.extract_strided_slice %38 {offsets = [0, 0], sizes = [24, 16], strides = [1, 1]} : vector<32x16xf32> to vector<24x16xf32>
    %41 = arith.mulf %39, %40 : vector<24x16xf32>
    %42 = vector.extract_strided_slice %31 {offsets = [24, 0], sizes = [8, 16], strides = [1, 1]} : vector<32x16xf32> to vector<8x16xf32>
    %43 = vector.extract_strided_slice %38 {offsets = [16, 0], sizes = [8, 16], strides = [1, 1]} : vector<32x16xf32> to vector<8x16xf32>
    %44 = arith.mulf %42, %43 : vector<8x16xf32>
    %45 = vector.extract_strided_slice %31 {offsets = [16, 0], sizes = [8, 16], strides = [1, 1]} : vector<32x16xf32> to vector<8x16xf32>
    %46 = vector.extract_strided_slice %38 {offsets = [24, 0], sizes = [8, 16], strides = [1, 1]} : vector<32x16xf32> to vector<8x16xf32>
    %47 = arith.mulf %45, %46 : vector<8x16xf32>
    %48 = arith.addf %44, %47 : vector<8x16xf32>
    %49 = tpu.concatenate %41, %48 in 0 : vector<24x16xf32>, vector<8x16xf32> -> vector<32x16xf32>
    %c56 = arith.constant 56 : index
    %c0_17 = arith.constant 0 : index
    %50 = vector.load %arg4[%c56, %c0_17] : memref<136x16xf32, #tpu.memory_space<vmem>>, vector<16x16xf32>
    %c72 = arith.constant 72 : index
    %c0_18 = arith.constant 0 : index
    %51 = vector.load %arg4[%c72, %c0_18] : memref<136x16xf32, #tpu.memory_space<vmem>>, vector<1x16xf32>
    %cst_19 = arith.constant dense<0.000000e+00> : vector<32x16xf32>
    %52 = tpu.matmul %49, %50, %cst_19 {dimension_numbers = #tpu.dot_dimension_numbers<[1], [0], [0], [1], [0, 0, 1, 1], [], []>} : vector<32x16xf32>, vector<16x16xf32>, vector<32x16xf32> -> vector<32x16xf32>
    %53 = vector.broadcast %9 : vector<32x1xf32> to vector<32x16xf32>
    %54 = vector.broadcast %51 : vector<1x16xf32> to vector<32x16xf32>
    %55 = arith.mulf %53, %54 : vector<32x16xf32>
    %56 = arith.addf %52, %55 : vector<32x16xf32>
    %c80 = arith.constant 80 : index
    %c0_20 = arith.constant 0 : index
    %57 = vector.load %arg4[%c80, %c0_20] : memref<136x16xf32, #tpu.memory_space<vmem>>, vector<16x16xf32>
    %c96 = arith.constant 96 : index
    %c0_21 = arith.constant 0 : index
    %58 = vector.load %arg4[%c96, %c0_21] : memref<136x16xf32, #tpu.memory_space<vmem>>, vector<1x16xf32>
    %cst_22 = arith.constant dense<0.000000e+00> : vector<32x16xf32>
    %59 = tpu.matmul %49, %57, %cst_22 {dimension_numbers = #tpu.dot_dimension_numbers<[1], [0], [0], [1], [0, 0, 1, 1], [], []>} : vector<32x16xf32>, vector<16x16xf32>, vector<32x16xf32> -> vector<32x16xf32>
    %60 = vector.broadcast %9 : vector<32x1xf32> to vector<32x16xf32>
    %61 = vector.broadcast %58 : vector<1x16xf32> to vector<32x16xf32>
    %62 = arith.mulf %60, %61 : vector<32x16xf32>
    %63 = arith.addf %59, %62 : vector<32x16xf32>
    %64 = vector.extract_strided_slice %56 {offsets = [0, 0], sizes = [24, 16], strides = [1, 1]} : vector<32x16xf32> to vector<24x16xf32>
    %65 = vector.extract_strided_slice %63 {offsets = [0, 0], sizes = [24, 16], strides = [1, 1]} : vector<32x16xf32> to vector<24x16xf32>
    %66 = arith.mulf %64, %65 : vector<24x16xf32>
    %67 = vector.extract_strided_slice %56 {offsets = [24, 0], sizes = [8, 16], strides = [1, 1]} : vector<32x16xf32> to vector<8x16xf32>
    %68 = vector.extract_strided_slice %63 {offsets = [16, 0], sizes = [8, 16], strides = [1, 1]} : vector<32x16xf32> to vector<8x16xf32>
    %69 = arith.mulf %67, %68 : vector<8x16xf32>
    %70 = vector.extract_strided_slice %56 {offsets = [16, 0], sizes = [8, 16], strides = [1, 1]} : vector<32x16xf32> to vector<8x16xf32>
    %71 = vector.extract_strided_slice %63 {offsets = [24, 0], sizes = [8, 16], strides = [1, 1]} : vector<32x16xf32> to vector<8x16xf32>
    %72 = arith.mulf %70, %71 : vector<8x16xf32>
    %73 = arith.addf %69, %72 : vector<8x16xf32>
    %74 = tpu.concatenate %66, %73 in 0 : vector<24x16xf32>, vector<8x16xf32> -> vector<32x16xf32>
    %c104 = arith.constant 104 : index
    %c0_23 = arith.constant 0 : index
    %75 = vector.load %arg4[%c104, %c0_23] : memref<136x16xf32, #tpu.memory_space<vmem>>, vector<16x16xf32>
    %c120 = arith.constant 120 : index
    %c0_24 = arith.constant 0 : index
    %76 = vector.load %arg4[%c120, %c0_24] : memref<136x16xf32, #tpu.memory_space<vmem>>, vector<1x16xf32>
    %cst_25 = arith.constant dense<0.000000e+00> : vector<32x16xf32>
    %77 = tpu.matmul %74, %75, %cst_25 {dimension_numbers = #tpu.dot_dimension_numbers<[1], [0], [0], [1], [0, 0, 1, 1], [], []>} : vector<32x16xf32>, vector<16x16xf32>, vector<32x16xf32> -> vector<32x16xf32>
    %78 = vector.broadcast %9 : vector<32x1xf32> to vector<32x16xf32>
    %79 = vector.broadcast %76 : vector<1x16xf32> to vector<32x16xf32>
    %80 = arith.mulf %78, %79 : vector<32x16xf32>
    %81 = arith.addf %77, %80 : vector<32x16xf32>
    %c128 = arith.constant 128 : index
    %c0_26 = arith.constant 0 : index
    %82 = vector.load %arg4[%c128, %c0_26] : memref<136x16xf32, #tpu.memory_space<vmem>>, vector<1x16xf32>
    %83 = vector.broadcast %82 : vector<1x16xf32> to vector<32x16xf32>
    %84 = arith.mulf %81, %83 : vector<32x16xf32>
    %cst_27 = arith.constant dense<0.000000e+00> : vector<32xf32>
    %85 = vector.multi_reduction <add>, %84, %cst_27 [1] : vector<32x16xf32> to vector<32xf32>
    %86 = vector.shape_cast %85 : vector<32xf32> to vector<32x1xf32>
    %c0_28 = arith.constant 0 : index
    %c0_29 = arith.constant 0 : index
    %87 = vector.load %arg5[%c0_28, %c0_29] : memref<32x1xf32, #tpu.memory_space<vmem>>, vector<32x1xf32>
    tpu.vector_store %arg5[%c0_28, %c0_29], %86 {strides = array<i32>} : memref<32x1xf32, #tpu.memory_space<vmem>>, vector<32x1xf32>,
    return
  }
}

</mosaic_0001>

<llo_original>
// kernel: net_forward.1
$region0: #{net_forward.1}
  #allocation0 [shape = 'u32[]', space=smem, size = 0x4, offset = 0x4, fixed_abs, tag = 'smem constant byte address 0x4 - core index']
  #allocation1 [shape = 'u32[144,128]{1,0:T(1,128)}', space=vmem, size = 0x12000, scoped, tag = 'internal scratch']
  %s0 = inlined_call_operand.vmem [shape: f32[8,4], index: 0, kind: input, shape index: {}]
  %s1 = inlined_call_operand.vmem [shape: f32[8,4], index: 1, kind: input, shape index: {}]
  %s2 = inlined_call_operand.vmem [shape: f32[8,4], index: 2, kind: input, shape index: {}]
  %s3 = inlined_call_operand.vmem [shape: f32[8,4], index: 3, kind: input, shape index: {}]
  %s4 = inlined_call_operand.vmem [shape: f32[136,16], index: 4, kind: input, shape index: {}]
  %s5 = inlined_call_operand.vmem [shape: f32[32,1], index: 5, kind: output, shape index: {}]
  %s6 = sld [smem:[#allocation0]]
  $region30: #{net_forward.1} parent=0
    _
  %s8 = ssub.s32 1, %s6
  %s9 = scalar_select 0, %s8, %s6
  // Predicated region
  $region2: #{net_forward.1} parent=0 // pred_check
    _
  $region3: #{net_forward.1} parent=0 // pred_check_branch
    %11 = sbr.rel (0) target = $region5
  $region4: #{net_forward.1} parent=0 // pred_region
    _
  $region5: #{net_forward.1} parent=0 // pred_fallthru
    _
  // Predicated region
  $region6: #{net_forward.1} parent=0 // pred_check
    _
  $region7: #{net_forward.1} parent=0 // pred_check_branch
    %13 = sbr.rel (0) target = $region9
  $region8: #{net_forward.1} parent=0 // pred_region
    _
  $region9: #{net_forward.1} parent=0 // pred_fallthru
    _
  // Predicated region
  $region10: #{net_forward.1} parent=0 // pred_check
    _
  $region11: #{net_forward.1} parent=0 // pred_check_branch
    %15 = sbr.rel (0) target = $region13
  $region12: #{net_forward.1} parent=0 // pred_region
    _
  $region13: #{net_forward.1} parent=0 // pred_fallthru
    _
  // Predicated region
  $region14: #{net_forward.1} parent=0 // pred_check
    _
  $region15: #{net_forward.1} parent=0 // pred_check_branch
    %17 = sbr.rel (0) target = $region17
  $region16: #{net_forward.1} parent=0 // pred_region
    _
  $region17: #{net_forward.1} parent=0 // pred_fallthru
    _
  // Predicated region
  $region18: #{net_forward.1} parent=0 // pred_check
    _
  $region19: #{net_forward.1} parent=0 // pred_check_branch
    %19 = sbr.rel (0) target = $region21
  $region20: #{net_forward.1} parent=0 // pred_region
    _
  $region21: #{net_forward.1} parent=0 // pred_fallthru
    _
  %v20 = vld [vmem:[%s0] sm:$0xff]
  %v21 = vld [vmem:[%s1] sm:$0xff]
  %v22 = vld [vmem:[%s2] sm:$0xff]
  %v23 = vld [vmem:[%s3] sm:$0xff]
  %v24 = vlaneseq
  %v25 = vshrl.u32 %v24, 7
  %v26 = vadd.s32 %v25, 8
  %v27 = vadd.s32 %v25, 16
  %v28 = vadd.s32 %v25, 24
  %vm29 = vcmp.lt.s32.totalorder %v25, 24
  %vm30 = vcmp.lt.s32.totalorder %v26, 24
  %vm31 = vcmp.lt.s32.totalorder %v27, 24
  %vm32 = vcmp.lt.s32.totalorder %v28, 24
  %v33 = vsel %vm29, 1, 0
  %v34 = vsel %vm30, 1, 0
  %v35 = vsel %vm31, 1, 0
  %v36 = vsel %vm32, 1, 0
  %v37 = vcvt.s32.f32 %v33
  %v38 = vcvt.s32.f32 %v34
  %v39 = vcvt.s32.f32 %v35
  %v40 = vcvt.s32.f32 %v36
  %v41 = vld [vmem:[%s4] sm:$0xf]
  %v42 = vld [vmem:[%s4 + $0x8] sm:$0x1]
  %v43 = vlaneseq
  %v44 = vshrl.u32 %v43, 7
  %v45 = vsub.s32 0, %v44
  %v46 = vrot.slane %v42, %v45
  %v47 = vmul.f32 %v37, %v46
  %v48 = vmul.f32 %v38, %v46
  %v49 = vmul.f32 %v39, %v46
  %v50 = vmul.f32 %v40, %v46
  %vm51 = vcmask 31744
  %v53 = vsel %vm51, %v20, 0
  %v56 = vsel %vm51, %v21, 0
  %v59 = vsel %vm51, %v22, 0
  %v62 = vsel %vm51, %v23, 0
  %vm64 = vcmask 1043456
  %v66 = vsel %vm64, %v41, 0
  %68 = vmatprep.subr.mxu0 0.0
  %69 = vmatpush1.msra.mxu0 %v66
  %70 = vmatprep.subr.mxu0 0.0
  %71 = vmatpush1.msra.mxu0 0.0
  %72 = vmatprep.subr.mxu0 0.0
  %73 = vmatpush1.msra.mxu0 0.0
  %74 = vmatprep.subr.mxu0 0.0
  %75 = vmatpush1.msra.mxu0 0.0
  %76 = vmatprep.subr.mxu0 0.0
  %77 = vmatpush1.msra.mxu0 0.0
  %78 = vmatprep.subr.mxu0 0.0
  %79 = vmatpush1.msra.mxu0 0.0
  %80 = vmatprep.subr.mxu0 0.0
  %81 = vmatpush1.msra.mxu0 0.0
  %82 = vmatprep.subr.mxu0 0.0
  %83 = vmatpush1.msra.mxu0 0.0
  %84 = vmatprep.subr.mxu0 0.0
  %85 = vmatpush1.msra.mxu0 0.0
  %86 = vmatprep.subr.mxu0 0.0
  %87 = vmatpush1.msra.mxu0 0.0
  %88 = vmatprep.subr.mxu0 0.0
  %89 = vmatpush1.msra.mxu0 0.0
  %90 = vmatprep.subr.mxu0 0.0
  %91 = vmatpush1.msra.mxu0 0.0
  %92 = vmatprep.subr.mxu0 0.0
  %93 = vmatpush1.msra.mxu0 0.0
  %94 = vmatprep.subr.mxu0 0.0
  %95 = vmatpush1.msra.mxu0 0.0
  %96 = vmatprep.subr.mxu0 0.0
  %97 = vmatpush1.msra.mxu0 0.0
  %98 = vmatprep.subr.mxu0 0.0
  %99 = vmatpush1.msra.mxu0 0.0
  %100 = vmatprep.subr.mxu0 0.0
  %101 = vmatpush1.msra.mxu0 0.0
  %102 = vmatprep.subr.mxu0 0.0
  %103 = vmatpush1.msra.mxu0 0.0
  %104 = vmatprep.subr.mxu0 0.0
  %105 = vmatpush1.msra.mxu0 0.0
  %106 = vmatprep.subr.mxu0 0.0
  %107 = vmatpush1.msra.mxu0 0.0
  %108 = vmatprep.subr.mxu0 0.0
  %109 = vmatpush1.msra.mxu0 0.0
  %110 = vmatprep.subr.mxu0 0.0
  %111 = vmatpush1.msra.mxu0 0.0
  %112 = vmatprep.subr.mxu0 0.0
  %113 = vmatpush1.msra.mxu0 0.0
  %114 = vmatprep.subr.mxu0 0.0
  %115 = vmatpush1.msra.mxu0 0.0
  %116 = vmatprep.subr.mxu0 0.0
  %117 = vmatpush1.msra.mxu0 0.0
  %118 = vmatprep.subr.mxu0 0.0
  %119 = vmatpush1.msra.mxu0 0.0
  %120 = vmatprep.subr.mxu0 0.0
  %121 = vmatpush1.msra.mxu0 0.0
  %122 = vmatprep.subr.mxu0 0.0
  %123 = vmatpush1.msra.mxu0 0.0
  %124 = vmatprep.subr.mxu0 0.0
  %125 = vmatpush1.msra.mxu0 0.0
  %126 = vmatprep.subr.mxu0 0.0
  %127 = vmatpush1.msra.mxu0 0.0
  %128 = vmatprep.subr.mxu0 0.0
  %129 = vmatpush1.msra.mxu0 0.0
  %130 = vmatprep.subr.mxu0 0.0
  %131 = vmatpush1.msra.mxu0 0.0
  %132 = vmatprep.mubr.f32.mxu0 0.0
  %133 = vmatmul.mubr.f32.gmra.mrb[0].mxu0 %v53
  %v134 = vpop.f32.mrb[0].mxu0
  %v135 = vadd.f32 %v47, %v134
  %v136 = vpop.f32.mrb[0].mxu0
  %137 = vmatprep.mubr.f32.mxu0 0.0
  %138 = vmatmul.mubr.f32.gmra.mrb[0].mxu0 %v56
  %v139 = vpop.f32.mrb[0].mxu0
  %v140 = vadd.f32 %v48, %v139
  %v141 = vpop.f32.mrb[0].mxu0
  %142 = vmatprep.mubr.f32.mxu0 0.0
  %143 = vmatmul.mubr.f32.gmra.mrb[0].mxu0 %v59
  %v144 = vpop.f32.mrb[0].mxu0
  %v145 = vadd.f32 %v49, %v144
  %v146 = vpop.f32.mrb[0].mxu0
  %147 = vmatprep.mubr.f32.mxu0 0.0
  %148 = vmatmul.mubr.f32.gmra.mrb[0].mxu0 %v62
  %v149 = vpop.f32.mrb[0].mxu0
  %v150 = vadd.f32 %v50, %v149
  %v151 = vpop.f32.mrb[0].mxu0
  %152 = vdwg.mxu0
  %v153 = vmul.f32 %v135, %v135
  %v154 = vmul.f32 %v140, %v140
  %v155 = vmul.f32 %v145, %v145
  %v156 = vmul.f32 %v145, 2.0
  %v157 = vmul.f32 %v156, %v150
  %v158 = vld [vmem:[%s4 + $0x10] sm:$0xff]
  %v159 = vld [vmem:[%s4 + $0x18] sm:$0xff]
  %v160 = vld [vmem:[%s4 + $0x20] sm:$0x1]
  %v161 = vlaneseq
  %v162 = vshrl.u32 %v161, 7
  %v163 = vsub.s32 0, %v162
  %v164 = vrot.slane %v160, %v163
  %v165 = vmul.f32 %v37, %v164
  %v166 = vmul.f32 %v38, %v164
  %v167 = vmul.f32 %v39, %v164
  %v168 = vmul.f32 %v40, %v164
  %vm169 = vcmask 130048
  %v171 = vsel %vm169, %v153, 0
  %v174 = vsel %vm169, %v154, 0
  %v177 = vsel %vm169, %v155, 0
  %v180 = vsel %vm169, %v157, 0
  %182 = vmatprep.subr.mxu0 0.0
  %183 = vmatpush1.msra.mxu0 %v158
  %184 = vmatprep.subr.mxu0 0.0
  %185 = vmatpush1.msra.mxu0 %v159
  %186 = vmatprep.subr.mxu0 0.0
  %187 = vmatpush1.msra.mxu0 0.0
  %188 = vmatprep.subr.mxu0 0.0
  %189 = vmatpush1.msra.mxu0 0.0
  %190 = vmatprep.subr.mxu0 0.0
  %191 = vmatpush1.msra.mxu0 0.0
  %192 = vmatprep.subr.mxu0 0.0
  %193 = vmatpush1.msra.mxu0 0.0
  %194 = vmatprep.subr.mxu0 0.0
  %195 = vmatpush1.msra.mxu0 0.0
  %196 = vmatprep.subr.mxu0 0.0
  %197 = vmatpush1.msra.mxu0 0.0
  %198 = vmatprep.subr.mxu0 0.0
  %199 = vmatpush1.msra.mxu0 0.0
  %200 = vmatprep.subr.mxu0 0.0
  %201 = vmatpush1.msra.mxu0 0.0
  %202 = vmatprep.subr.mxu0 0.0
  %203 = vmatpush1.msra.mxu0 0.0
  %204 = vmatprep.subr.mxu0 0.0
  %205 = vmatpush1.msra.mxu0 0.0
  %206 = vmatprep.subr.mxu0 0.0
  %207 = vmatpush1.msra.mxu0 0.0
  %208 = vmatprep.subr.mxu0 0.0
  %209 = vmatpush1.msra.mxu0 0.0
  %210 = vmatprep.subr.mxu0 0.0
  %211 = vmatpush1.msra.mxu0 0.0
  %212 = vmatprep.subr.mxu0 0.0
  %213 = vmatpush1.msra.mxu0 0.0
  %214 = vmatprep.subr.mxu0 0.0
  %215 = vmatpush1.msra.mxu0 0.0
  %216 = vmatprep.subr.mxu0 0.0
  %217 = vmatpush1.msra.mxu0 0.0
  %218 = vmatprep.subr.mxu0 0.0
  %219 = vmatpush1.msra.mxu0 0.0
  %220 = vmatprep.subr.mxu0 0.0
  %221 = vmatpush1.msra.mxu0 0.0
  %222 = vmatprep.subr.mxu0 0.0
  %223 = vmatpush1.msra.mxu0 0.0
  %224 = vmatprep.subr.mxu0 0.0
  %225 = vmatpush1.msra.mxu0 0.0
  %226 = vmatprep.subr.mxu0 0.0
  %227 = vmatpush1.msra.mxu0 0.0
  %228 = vmatprep.subr.mxu0 0.0
  %229 = vmatpush1.msra.mxu0 0.0
  %230 = vmatprep.subr.mxu0 0.0
  %231 = vmatpush1.msra.mxu0 0.0
  %232 = vmatprep.subr.mxu0 0.0
  %233 = vmatpush1.msra.mxu0 0.0
  %234 = vmatprep.subr.mxu0 0.0
  %235 = vmatpush1.msra.mxu0 0.0
  %236 = vmatprep.subr.mxu0 0.0
  %237 = vmatpush1.msra.mxu0 0.0
  %238 = vmatprep.subr.mxu0 0.0
  %239 = vmatpush1.msra.mxu0 0.0
  %240 = vmatprep.subr.mxu0 0.0
  %241 = vmatpush1.msra.mxu0 0.0
  %242 = vmatprep.subr.mxu0 0.0
  %243 = vmatpush1.msra.mxu0 0.0
  %244 = vmatprep.subr.mxu0 0.0
  %245 = vmatpush1.msra.mxu0 0.0
  %246 = vmatprep.mubr.f32.mxu0 0.0
  %247 = vmatmul.mubr.f32.gmra.mrb[0].mxu0 %v171
  %v248 = vpop.f32.mrb[0].mxu0
  %v249 = vadd.f32 %v165, %v248
  %v250 = vpop.f32.mrb[0].mxu0
  %251 = vmatprep.mubr.f32.mxu0 0.0
  %252 = vmatmul.mubr.f32.gmra.mrb[0].mxu0 %v174
  %v253 = vpop.f32.mrb[0].mxu0
  %v254 = vadd.f32 %v166, %v253
  %v255 = vpop.f32.mrb[0].mxu0
  %256 = vmatprep.mubr.f32.mxu0 0.0
  %257 = vmatmul.mubr.f32.gmra.mrb[0].mxu0 %v177
  %v258 = vpop.f32.mrb[0].mxu0
  %v259 = vadd.f32 %v167, %v258
  %v260 = vpop.f32.mrb[0].mxu0
  %261 = vmatprep.mubr.f32.mxu0 0.0
  %262 = vmatmul.mubr.f32.gmra.mrb[0].mxu0 %v180
  %v263 = vpop.f32.mrb[0].mxu0
  %v264 = vadd.f32 %v168, %v263
  %v265 = vpop.f32.mrb[0].mxu0
  %266 = vdwg.mxu0
  %v267 = vld [vmem:[%s4 + $0x28] sm:$0xf]
  %v268 = vld [vmem:[%s4 + $0x30] sm:$0x1]
  %v269 = vlaneseq
  %v270 = vshrl.u32 %v269, 7
  %v271 = vsub.s32 0, %v270
  %v272 = vrot.slane %v268, %v271
  %v273 = vmul.f32 %v37, %v272
  %v274 = vmul.f32 %v38, %v272
  %v275 = vmul.f32 %v39, %v272
  %v276 = vmul.f32 %v40, %v272
  %v278 = vsel %vm64, %v267, 0
  %280 = vmatprep.subr.mxu0 0.0
  %281 = vmatpush1.msra.mxu0 %v278
  %282 = vmatprep.subr.mxu0 0.0
  %283 = vmatpush1.msra.mxu0 0.0
  %284 = vmatprep.subr.mxu0 0.0
  %285 = vmatpush1.msra.mxu0 0.0
  %286 = vmatprep.subr.mxu0 0.0
  %287 = vmatpush1.msra.mxu0 0.0
  %288 = vmatprep.subr.mxu0 0.0
  %289 = vmatpush1.msra.mxu0 0.0
  %290 = vmatprep.subr.mxu0 0.0
  %291 = vmatpush1.msra.mxu0 0.0
  %292 = vmatprep.subr.mxu0 0.0
  %293 = vmatpush1.msra.mxu0 0.0
  %294 = vmatprep.subr.mxu0 0.0
  %295 = vmatpush1.msra.mxu0 0.0
  %296 = vmatprep.subr.mxu0 0.0
  %297 = vmatpush1.msra.mxu0 0.0
  %298 = vmatprep.subr.mxu0 0.0
  %299 = vmatpush1.msra.mxu0 0.0
  %300 = vmatprep.subr.mxu0 0.0
  %301 = vmatpush1.msra.mxu0 0.0
  %302 = vmatprep.subr.mxu0 0.0
  %303 = vmatpush1.msra.mxu0 0.0
  %304 = vmatprep.subr.mxu0 0.0
  %305 = vmatpush1.msra.mxu0 0.0
  %306 = vmatprep.subr.mxu0 0.0
  %307 = vmatpush1.msra.mxu0 0.0
  %308 = vmatprep.subr.mxu0 0.0
  %309 = vmatpush1.msra.mxu0 0.0
  %310 = vmatprep.subr.mxu0 0.0
  %311 = vmatpush1.msra.mxu0 0.0
  %312 = vmatprep.subr.mxu0 0.0
  %313 = vmatpush1.msra.mxu0 0.0
  %314 = vmatprep.subr.mxu0 0.0
  %315 = vmatpush1.msra.mxu0 0.0
  %316 = vmatprep.subr.mxu0 0.0
  %317 = vmatpush1.msra.mxu0 0.0
  %318 = vmatprep.subr.mxu0 0.0
  %319 = vmatpush1.msra.mxu0 0.0
  %320 = vmatprep.subr.mxu0 0.0
  %321 = vmatpush1.msra.mxu0 0.0
  %322 = vmatprep.subr.mxu0 0.0
  %323 = vmatpush1.msra.mxu0 0.0
  %324 = vmatprep.subr.mxu0 0.0
  %325 = vmatpush1.msra.mxu0 0.0
  %326 = vmatprep.subr.mxu0 0.0
  %327 = vmatpush1.msra.mxu0 0.0
  %328 = vmatprep.subr.mxu0 0.0
  %329 = vmatpush1.msra.mxu0 0.0
  %330 = vmatprep.subr.mxu0 0.0
  %331 = vmatpush1.msra.mxu0 0.0
  %332 = vmatprep.subr.mxu0 0.0
  %333 = vmatpush1.msra.mxu0 0.0
  %334 = vmatprep.subr.mxu0 0.0
  %335 = vmatpush1.msra.mxu0 0.0
  %336 = vmatprep.subr.mxu0 0.0
  %337 = vmatpush1.msra.mxu0 0.0
  %338 = vmatprep.subr.mxu0 0.0
  %339 = vmatpush1.msra.mxu0 0.0
  %340 = vmatprep.subr.mxu0 0.0
  %341 = vmatpush1.msra.mxu0 0.0
  %342 = vmatprep.subr.mxu0 0.0
  %343 = vmatpush1.msra.mxu0 0.0
  %344 = vmatprep.mubr.f32.mxu0 0.0
  %345 = vmatmul.mubr.f32.gmra.mrb[0].mxu0 %v53
  %v346 = vpop.f32.mrb[0].mxu0
  %v347 = vadd.f32 %v273, %v346
  %v348 = vpop.f32.mrb[0].mxu0
  %349 = vmatprep.mubr.f32.mxu0 0.0
  %350 = vmatmul.mubr.f32.gmra.mrb[0].mxu0 %v56
  %v351 = vpop.f32.mrb[0].mxu0
  %v352 = vadd.f32 %v274, %v351
  %v353 = vpop.f32.mrb[0].mxu0
  %354 = vmatprep.mubr.f32.mxu0 0.0
  %355 = vmatmul.mubr.f32.gmra.mrb[0].mxu0 %v59
  %v356 = vpop.f32.mrb[0].mxu0
  %v357 = vadd.f32 %v275, %v356
  %v358 = vpop.f32.mrb[0].mxu0
  %359 = vmatprep.mubr.f32.mxu0 0.0
  %360 = vmatmul.mubr.f32.gmra.mrb[0].mxu0 %v62
  %v361 = vpop.f32.mrb[0].mxu0
  %v362 = vadd.f32 %v276, %v361
  %v363 = vpop.f32.mrb[0].mxu0
  %364 = vdwg.mxu0
  %v365 = vmul.f32 %v249, %v347
  %v366 = vmul.f32 %v254, %v352
  %v367 = vmul.f32 %v259, %v357
  %v368 = vmul.f32 %v264, %v357
  %v369 = vmul.f32 %v259, %v362
  %v370 = vadd.f32 %v368, %v369
  %v371 = vld [vmem:[%s4 + $0x38] sm:$0xff]
  %v372 = vld [vmem:[%s4 + $0x40] sm:$0xff]
  %v373 = vld [vmem:[%s4 + $0x48] sm:$0x1]
  %v374 = vlaneseq
  %v375 = vshrl.u32 %v374, 7
  %v376 = vsub.s32 0, %v375
  %v377 = vrot.slane %v373, %v376
  %v378 = vmul.f32 %v37, %v377
  %v379 = vmul.f32 %v38, %v377
  %v380 = vmul.f32 %v39, %v377
  %v381 = vmul.f32 %v40, %v377
  %v383 = vsel %vm169, %v365, 0
  %v386 = vsel %vm169, %v366, 0
  %v389 = vsel %vm169, %v367, 0
  %v392 = vsel %vm169, %v370, 0
  %394 = vmatprep.subr.mxu0 0.0
  %395 = vmatpush1.msra.mxu0 %v371
  %396 = vmatprep.subr.mxu0 0.0
  %397 = vmatpush1.msra.mxu0 %v372
  %398 = vmatprep.subr.mxu0 0.0
  %399 = vmatpush1.msra.mxu0 0.0
  %400 = vmatprep.subr.mxu0 0.0
  %401 = vmatpush1.msra.mxu0 0.0
  %402 = vmatprep.subr.mxu0 0.0
  %403 = vmatpush1.msra.mxu0 0.0
  %404 = vmatprep.subr.mxu0 0.0
  %405 = vmatpush1.msra.mxu0 0.0
  %406 = vmatprep.subr.mxu0 0.0
  %407 = vmatpush1.msra.mxu0 0.0
  %408 = vmatprep.subr.mxu0 0.0
  %409 = vmatpush1.msra.mxu0 0.0
  %410 = vmatprep.subr.mxu0 0.0
  %411 = vmatpush1.msra.mxu0 0.0
  %412 = vmatprep.subr.mxu0 0.0
  %413 = vmatpush1.msra.mxu0 0.0
  %414 = vmatprep.subr.mxu0 0.0
  %415 = vmatpush1.msra.mxu0 0.0
  %416 = vmatprep.subr.mxu0 0.0
  %417 = vmatpush1.msra.mxu0 0.0
  %418 = vmatprep.subr.mxu0 0.0
  %419 = vmatpush1.msra.mxu0 0.0
  %420 = vmatprep.subr.mxu0 0.0
  %421 = vmatpush1.msra.mxu0 0.0
  %422 = vmatprep.subr.mxu0 0.0
  %423 = vmatpush1.msra.mxu0 0.0
  %424 = vmatprep.subr.mxu0 0.0
  %425 = vmatpush1.msra.mxu0 0.0
  %426 = vmatprep.subr.mxu0 0.0
  %427 = vmatpush1.msra.mxu0 0.0
  %428 = vmatprep.subr.mxu0 0.0
  %429 = vmatpush1.msra.mxu0 0.0
  %430 = vmatprep.subr.mxu0 0.0
  %431 = vmatpush1.msra.mxu0 0.0
  %432 = vmatprep.subr.mxu0 0.0
  %433 = vmatpush1.msra.mxu0 0.0
  %434 = vmatprep.subr.mxu0 0.0
  %435 = vmatpush1.msra.mxu0 0.0
  %436 = vmatprep.subr.mxu0 0.0
  %437 = vmatpush1.msra.mxu0 0.0
  %438 = vmatprep.subr.mxu0 0.0
  %439 = vmatpush1.msra.mxu0 0.0
  %440 = vmatprep.subr.mxu0 0.0
  %441 = vmatpush1.msra.mxu0 0.0
  %442 = vmatprep.subr.mxu0 0.0
  %443 = vmatpush1.msra.mxu0 0.0
  %444 = vmatprep.subr.mxu0 0.0
  %445 = vmatpush1.msra.mxu0 0.0
  %446 = vmatprep.subr.mxu0 0.0
  %447 = vmatpush1.msra.mxu0 0.0
  %448 = vmatprep.subr.mxu0 0.0
  %449 = vmatpush1.msra.mxu0 0.0
  %450 = vmatprep.subr.mxu0 0.0
  %451 = vmatpush1.msra.mxu0 0.0
  %452 = vmatprep.subr.mxu0 0.0
  %453 = vmatpush1.msra.mxu0 0.0
  %454 = vmatprep.subr.mxu0 0.0
  %455 = vmatpush1.msra.mxu0 0.0
  %456 = vmatprep.subr.mxu0 0.0
  %457 = vmatpush1.msra.mxu0 0.0
  %458 = vmatprep.mubr.f32.mxu0 0.0
  %459 = vmatmul.mubr.f32.gmra.mrb[0].mxu0 %v383
  %v460 = vpop.f32.mrb[0].mxu0
  %v461 = vadd.f32 %v378, %v460
  %v462 = vpop.f32.mrb[0].mxu0
  %463 = vmatprep.mubr.f32.mxu0 0.0
  %464 = vmatmul.mubr.f32.gmra.mrb[0].mxu0 %v386
  %v465 = vpop.f32.mrb[0].mxu0
  %v466 = vadd.f32 %v379, %v465
  %v467 = vpop.f32.mrb[0].mxu0
  %468 = vmatprep.mubr.f32.mxu0 0.0
  %469 = vmatmul.mubr.f32.gmra.mrb[0].mxu0 %v389
  %v470 = vpop.f32.mrb[0].mxu0
  %v471 = vadd.f32 %v380, %v470
  %v472 = vpop.f32.mrb[0].mxu0
  %473 = vmatprep.mubr.f32.mxu0 0.0
  %474 = vmatmul.mubr.f32.gmra.mrb[0].mxu0 %v392
  %v475 = vpop.f32.mrb[0].mxu0
  %v476 = vadd.f32 %v381, %v475
  %v477 = vpop.f32.mrb[0].mxu0
  %478 = vdwg.mxu0
  %v479 = vld [vmem:[%s4 + $0x50] sm:$0xff]
  %v480 = vld [vmem:[%s4 + $0x58] sm:$0xff]
  %v481 = vld [vmem:[%s4 + $0x60] sm:$0x1]
  %v482 = vlaneseq
  %v483 = vshrl.u32 %v482, 7
  %v484 = vsub.s32 0, %v483
  %v485 = vrot.slane %v481, %v484
  %v486 = vmul.f32 %v37, %v485
  %v487 = vmul.f32 %v38, %v485
  %v488 = vmul.f32 %v39, %v485
  %v489 = vmul.f32 %v40, %v485
  %490 = vmatprep.subr.mxu0 0.0
  %491 = vmatpush1.msra.mxu0 %v479
  %492 = vmatprep.subr.mxu0 0.0
  %493 = vmatpush1.msra.mxu0 %v480
  %494 = vmatprep.subr.mxu0 0.0
  %495 = vmatpush1.msra.mxu0 0.0
  %496 = vmatprep.subr.mxu0 0.0
  %497 = vmatpush1.msra.mxu0 0.0
  %498 = vmatprep.subr.mxu0 0.0
  %499 = vmatpush1.msra.mxu0 0.0
  %500 = vmatprep.subr.mxu0 0.0
  %501 = vmatpush1.msra.mxu0 0.0
  %502 = vmatprep.subr.mxu0 0.0
  %503 = vmatpush1.msra.mxu0 0.0
  %504 = vmatprep.subr.mxu0 0.0
  %505 = vmatpush1.msra.mxu0 0.0
  %506 = vmatprep.subr.mxu0 0.0
  %507 = vmatpush1.msra.mxu0 0.0
  %508 = vmatprep.subr.mxu0 0.0
  %509 = vmatpush1.msra.mxu0 0.0
  %510 = vmatprep.subr.mxu0 0.0
  %511 = vmatpush1.msra.mxu0 0.0
  %512 = vmatprep.subr.mxu0 0.0
  %513 = vmatpush1.msra.mxu0 0.0
  %514 = vmatprep.subr.mxu0 0.0
  %515 = vmatpush1.msra.mxu0 0.0
  %516 = vmatprep.subr.mxu0 0.0
  %517 = vmatpush1.msra.mxu0 0.0
  %518 = vmatprep.subr.mxu0 0.0
  %519 = vmatpush1.msra.mxu0 0.0
  %520 = vmatprep.subr.mxu0 0.0
  %521 = vmatpush1.msra.mxu0 0.0
  %522 = vmatprep.subr.mxu0 0.0
  %523 = vmatpush1.msra.mxu0 0.0
  %524 = vmatprep.subr.mxu0 0.0
  %525 = vmatpush1.msra.mxu0 0.0
  %526 = vmatprep.subr.mxu0 0.0
  %527 = vmatpush1.msra.mxu0 0.0
  %528 = vmatprep.subr.mxu0 0.0
  %529 = vmatpush1.msra.mxu0 0.0
  %530 = vmatprep.subr.mxu0 0.0
  %531 = vmatpush1.msra.mxu0 0.0
  %532 = vmatprep.subr.mxu0 0.0
  %533 = vmatpush1.msra.mxu0 0.0
  %534 = vmatprep.subr.mxu0 0.0
  %535 = vmatpush1.msra.mxu0 0.0
  %536 = vmatprep.subr.mxu0 0.0
  %537 = vmatpush1.msra.mxu0 0.0
  %538 = vmatprep.subr.mxu0 0.0
  %539 = vmatpush1.msra.mxu0 0.0
  %540 = vmatprep.subr.mxu0 0.0
  %541 = vmatpush1.msra.mxu0 0.0
  %542 = vmatprep.subr.mxu0 0.0
  %543 = vmatpush1.msra.mxu0 0.0
  %544 = vmatprep.subr.mxu0 0.0
  %545 = vmatpush1.msra.mxu0 0.0
  %546 = vmatprep.subr.mxu0 0.0
  %547 = vmatpush1.msra.mxu0 0.0
  %548 = vmatprep.subr.mxu0 0.0
  %549 = vmatpush1.msra.mxu0 0.0
  %550 = vmatprep.subr.mxu0 0.0
  %551 = vmatpush1.msra.mxu0 0.0
  %552 = vmatprep.subr.mxu0 0.0
  %553 = vmatpush1.msra.mxu0 0.0
  %554 = vmatprep.mubr.f32.mxu0 0.0
  %555 = vmatmul.mubr.f32.gmra.mrb[0].mxu0 %v383
  %v556 = vpop.f32.mrb[0].mxu0
  %v557 = vadd.f32 %v486, %v556
  %v558 = vpop.f32.mrb[0].mxu0
  %559 = vmatprep.mubr.f32.mxu0 0.0
  %560 = vmatmul.mubr.f32.gmra.mrb[0].mxu0 %v386
  %v561 = vpop.f32.mrb[0].mxu0
  %v562 = vadd.f32 %v487, %v561
  %v563 = vpop.f32.mrb[0].mxu0
  %564 = vmatprep.mubr.f32.mxu0 0.0
  %565 = vmatmul.mubr.f32.gmra.mrb[0].mxu0 %v389
  %v566 = vpop.f32.mrb[0].mxu0
  %v567 = vadd.f32 %v488, %v566
  %v568 = vpop.f32.mrb[0].mxu0
  %569 = vmatprep.mubr.f32.mxu0 0.0
  %570 = vmatmul.mubr.f32.gmra.mrb[0].mxu0 %v392
  %v571 = vpop.f32.mrb[0].mxu0
  %v572 = vadd.f32 %v489, %v571
  %v573 = vpop.f32.mrb[0].mxu0
  %574 = vdwg.mxu0
  %v575 = vmul.f32 %v461, %v557
  %v576 = vmul.f32 %v466, %v562
  %v577 = vmul.f32 %v471, %v567
  %v578 = vmul.f32 %v476, %v567
  %v579 = vmul.f32 %v471, %v572
  %v580 = vadd.f32 %v578, %v579
  %v581 = vld [vmem:[%s4 + $0x68] sm:$0xff]
  %v582 = vld [vmem:[%s4 + $0x70] sm:$0xff]
  %v583 = vld [vmem:[%s4 + $0x78] sm:$0x1]
  %v584 = vlaneseq
  %v585 = vshrl.u32 %v584, 7
  %v586 = vsub.s32 0, %v585
  %v587 = vrot.slane %v583, %v586
  %v588 = vmul.f32 %v37, %v587
  %v589 = vmul.f32 %v38, %v587
  %v590 = vmul.f32 %v39, %v587
  %v591 = vmul.f32 %v40, %v587
  %v593 = vsel %vm169, %v575, 0
  %v596 = vsel %vm169, %v576, 0
  %v599 = vsel %vm169, %v577, 0
  %v602 = vsel %vm169, %v580, 0
  %604 = vmatprep.subr.mxu0 0.0
  %605 = vmatpush1.msra.mxu0 %v581
  %606 = vmatprep.subr.mxu0 0.0
  %607 = vmatpush1.msra.mxu0 %v582
  %608 = vmatprep.subr.mxu0 0.0
  %609 = vmatpush1.msra.mxu0 0.0
  %610 = vmatprep.subr.mxu0 0.0
  %611 = vmatpush1.msra.mxu0 0.0
  %612 = vmatprep.subr.mxu0 0.0
  %613 = vmatpush1.msra.mxu0 0.0
  %614 = vmatprep.subr.mxu0 0.0
  %615 = vmatpush1.msra.mxu0 0.0
  %616 = vmatprep.subr.mxu0 0.0
  %617 = vmatpush1.msra.mxu0 0.0
  %618 = vmatprep.subr.mxu0 0.0
  %619 = vmatpush1.msra.mxu0 0.0
  %620 = vmatprep.subr.mxu0 0.0
  %621 = vmatpush1.msra.mxu0 0.0
  %622 = vmatprep.subr.mxu0 0.0
  %623 = vmatpush1.msra.mxu0 0.0
  %624 = vmatprep.subr.mxu0 0.0
  %625 = vmatpush1.msra.mxu0 0.0
  %626 = vmatprep.subr.mxu0 0.0
  %627 = vmatpush1.msra.mxu0 0.0
  %628 = vmatprep.subr.mxu0 0.0
  %629 = vmatpush1.msra.mxu0 0.0
  %630 = vmatprep.subr.mxu0 0.0
  %631 = vmatpush1.msra.mxu0 0.0
  %632 = vmatprep.subr.mxu0 0.0
  %633 = vmatpush1.msra.mxu0 0.0
  %634 = vmatprep.subr.mxu0 0.0
  %635 = vmatpush1.msra.mxu0 0.0
  %636 = vmatprep.subr.mxu0 0.0
  %637 = vmatpush1.msra.mxu0 0.0
  %638 = vmatprep.subr.mxu0 0.0
  %639 = vmatpush1.msra.mxu0 0.0
  %640 = vmatprep.subr.mxu0 0.0
  %641 = vmatpush1.msra.mxu0 0.0
  %642 = vmatprep.subr.mxu0 0.0
  %643 = vmatpush1.msra.mxu0 0.0
  %644 = vmatprep.subr.mxu0 0.0
  %645 = vmatpush1.msra.mxu0 0.0
  %646 = vmatprep.subr.mxu0 0.0
  %647 = vmatpush1.msra.mxu0 0.0
  %648 = vmatprep.subr.mxu0 0.0
  %649 = vmatpush1.msra.mxu0 0.0
  %650 = vmatprep.subr.mxu0 0.0
  %651 = vmatpush1.msra.mxu0 0.0
  %652 = vmatprep.subr.mxu0 0.0
  %653 = vmatpush1.msra.mxu0 0.0
  %654 = vmatprep.subr.mxu0 0.0
  %655 = vmatpush1.msra.mxu0 0.0
  %656 = vmatprep.subr.mxu0 0.0
  %657 = vmatpush1.msra.mxu0 0.0
  %658 = vmatprep.subr.mxu0 0.0
  %659 = vmatpush1.msra.mxu0 0.0
  %660 = vmatprep.subr.mxu0 0.0
  %661 = vmatpush1.msra.mxu0 0.0
  %662 = vmatprep.subr.mxu0 0.0
  %663 = vmatpush1.msra.mxu0 0.0
  %664 = vmatprep.subr.mxu0 0.0
  %665 = vmatpush1.msra.mxu0 0.0
  %666 = vmatprep.subr.mxu0 0.0
  %667 = vmatpush1.msra.mxu0 0.0
  %668 = vmatprep.mubr.f32.mxu0 0.0
  %669 = vmatmul.mubr.f32.gmra.mrb[0].mxu0 %v593
  %v670 = vpop.f32.mrb[0].mxu0
  %v671 = vadd.f32 %v588, %v670
  %v672 = vpop.f32.mrb[0].mxu0
  %673 = vmatprep.mubr.f32.mxu0 0.0
  %674 = vmatmul.mubr.f32.gmra.mrb[0].mxu0 %v596
  %v675 = vpop.f32.mrb[0].mxu0
  %v676 = vadd.f32 %v589, %v675
  %v677 = vpop.f32.mrb[0].mxu0
  %678 = vmatprep.mubr.f32.mxu0 0.0
  %679 = vmatmul.mubr.f32.gmra.mrb[0].mxu0 %v599
  %v680 = vpop.f32.mrb[0].mxu0
  %v681 = vadd.f32 %v590, %v680
  %v682 = vpop.f32.mrb[0].mxu0
  %683 = vmatprep.mubr.f32.mxu0 0.0
  %684 = vmatmul.mubr.f32.gmra.mrb[0].mxu0 %v602
  %v685 = vpop.f32.mrb[0].mxu0
  %v686 = vadd.f32 %v591, %v685
  %v687 = vpop.f32.mrb[0].mxu0
  %688 = vdwg.mxu0
  %v689 = vld [vmem:[%s4 + $0x80] sm:$0x1]
  %v690 = vlaneseq
  %v691 = vshrl.u32 %v690, 7
  %v692 = vsub.s32 0, %v691
  %v693 = vrot.slane %v689, %v692
  %v694 = vmul.f32 %v671, %v693
  %v695 = vmul.f32 %v676, %v693
  %v696 = vmul.f32 %v681, %v693
  %v697 = vmul.f32 %v686, %v693
  %v698 = vsel %vm169, %v694, 0.0
  %699 = vadd.xlane.f32.xlu0 %v698
  %v700 = vpop.xlane.xlu0 %699
  %v701 = vsel %vm169, %v695, 0.0
  %702 = vadd.xlane.f32.xlu0 %v701
  %v703 = vpop.xlane.xlu0 %702
  %v704 = vsel %vm169, %v696, 0.0
  %705 = vadd.xlane.f32.xlu0 %v704
  %v706 = vpop.xlane.xlu0 %705
  %v707 = vsel %vm169, %v697, 0.0
  %708 = vadd.xlane.f32.xlu0 %v707
  %v709 = vpop.xlane.xlu0 %708
  %vm710 = vcmask 7168
  %711 = vst.msk [vmem:[%s5] sm:$0xff] %vm710, %v700
  %712 = vst.msk [vmem:[%s5 + $0x8] sm:$0xff] %vm710, %v703
  %713 = vst.msk [vmem:[%s5 + $0x10] sm:$0xff] %vm710, %v706
  %714 = vst.msk [vmem:[%s5 + $0x18] sm:$0xff] %vm710, %v709
  // Predicated region
  $region22: #{net_forward.1} parent=0 // pred_check
    _
  $region23: #{net_forward.1} parent=0 // pred_check_branch
    %716 = sbr.rel (0) target = $region25
  $region24: #{net_forward.1} parent=0 // pred_region
    _
  $region25: #{net_forward.1} parent=0 // pred_fallthru
    _
  // Predicated region
  $region26: #{net_forward.1} parent=0 // pred_check
    _
  $region27: #{net_forward.1} parent=0 // pred_check_branch
    %718 = sbr.rel (0) target = $region29
  $region28: #{net_forward.1} parent=0 // pred_region
    _
  $region29: #{net_forward.1} parent=0 // pred_fallthru
    _

</llo_original>
